<compile_context>
chip_gen: v6e
topology: v6e:2x2x1
jax: 0.10.0
libtpu: 0.0.40
codegen_flags: <defaults>
</compile_context>

<pallas_src>
import functools

import jax
import jax.numpy as jnp
from jax.experimental import pallas as pl
from jax.experimental.pallas import tpu as pltpu

_LANES = 128


def _pe_gate_kernel_sigmoid(gate_ref, x_ref, o_ref):
    g = gate_ref[0]                                   # SMEM f32 scalar
    y = x_ref[...].astype(jnp.float32) * g
    o_ref[...] = pl.reciprocal(1.0 + jnp.exp(-y)).astype(o_ref.dtype)


def _pe_gate_kernel_identity(gate_ref, x_ref, o_ref):
    g = gate_ref[0]
    o_ref[...] = (x_ref[...].astype(jnp.float32) * g).astype(o_ref.dtype)


def _sublane_multiple(dtype) -> int:
    # packed sublane tile: (8,128) f32, (16,128) bf16, (32,128) int8/fp8
    itemsize = jnp.dtype(dtype).itemsize
    return max(8, 8 * (4 // max(1, itemsize)))


def _choose_tile_rows(rows: int, sub: int, block_rows: int) -> int:
    """Largest row tile that (a) is a multiple of `sub`, (b) divides `rows`,
    (c) is <= block_rows, and (d) leaves multiple grid blocks when possible
    (so the parallel axis shards across v7x's two TensorCores)."""
    m = rows // sub                        # rows is a multiple of sub
    cap = max(1, min(block_rows // sub, m))
    if m >= 16:
        cap = min(cap, max(1, m // 8))     # aim for >= 8 blocks
    elif m >= 2:
        cap = min(cap, max(1, m // 2))     # at least 2 blocks
    d = cap
    while m % d != 0:                      # largest divisor of m that is <= cap
        d -= 1
    return d * sub


def _pe_gate_2d(x2d, gate_arr, sigmoid: bool, block_rows: int, sub: int):
    rows, lanes = x2d.shape
    tr = _choose_tile_rows(rows, sub, block_rows)
    kernel = _pe_gate_kernel_sigmoid if sigmoid else _pe_gate_kernel_identity
    return pl.pallas_call(
        kernel,
        out_shape=jax.ShapeDtypeStruct((rows, lanes), x2d.dtype),
        grid_spec=pltpu.PrefetchScalarGridSpec(
            num_scalar_prefetch=0,
            grid=(rows // tr,),
            in_specs=[
                pl.BlockSpec(memory_space=pltpu.SMEM),         # gate scalar
                pl.BlockSpec((tr, lanes), lambda i: (i, 0)),   # x tile
            ],
            out_specs=pl.BlockSpec((tr, lanes), lambda i: (i, 0)),
        ),
        compiler_params=pltpu.CompilerParams(
            dimension_semantics=("parallel",)),
    )(gate_arr, x2d)


@functools.partial(jax.jit, static_argnames=("sigmoid", "block_rows"))
def pe_gate_forward(x, gate, *, sigmoid=True, block_rows=2048):
    """PEGate forward: sigmoid(x * gate) (or x * gate). x: any-shape float array."""
    orig_shape = x.shape
    dtype = x.dtype
    total = x.size
    gate_arr = jnp.asarray(gate, dtype=jnp.float32).reshape(1)

    def _xla(v):  # fallback path for tiny inputs / ragged tails
        y = v.astype(jnp.float32) * gate_arr[0]
        y = jax.nn.sigmoid(y) if sigmoid else y
        return y.astype(dtype)

    if total == 0:
        return x
    sub = _sublane_multiple(dtype)
    align = sub * _LANES
    if total < align:
        return _xla(x)                     # tiny input: not worth a kernel launch

    x_flat = x.reshape(-1)
    bulk = (total // align) * align        # aligned bulk goes through the kernel
    x2d = x_flat[:bulk].reshape(bulk // _LANES, _LANES)
    out_bulk = _pe_gate_2d(x2d, gate_arr, sigmoid, block_rows, sub).reshape(-1)

    if bulk == total:                      # common case: reshape only, no copies
        return out_bulk.reshape(orig_shape)

    tail = _xla(x_flat[bulk:])             # ragged tail (< sub*128 elements)
    return jnp.concatenate([out_bulk, tail]).reshape(orig_shape)


if __name__ == "__main__":
    key = jax.random.PRNGKey(0)
    init_value = 0.5
    gate = jnp.float32(init_value)         # nn.Parameter(torch.tensor(init_value))

    # NCHW input consistent with a conv-feature gate: (N=2, C=4, H=16, W=16)
    x = jax.random.normal(key, (2, 4, 16, 16), dtype=jnp.float32)

    out = jax.block_until_ready(pe_gate_forward(x, gate, sigmoid=True))
    ref = jax.nn.sigmoid(x * gate)
    assert out.shape == x.shape and out.dtype == x.dtype
    assert jnp.allclose(out, ref, atol=1e-5, rtol=1e-5)

    # sigmoid=False (Identity) path
    out_id = jax.block_until_ready(pe_gate_forward(x, gate, sigmoid=False))
    assert jnp.allclose(out_id, x * gate, atol=1e-6, rtol=1e-6)

    # ragged size (exercises kernel-bulk + XLA-tail path)
    x2 = jax.random.normal(jax.random.PRNGKey(1), (3, 5, 7, 11), dtype=jnp.float32)
    out2 = jax.block_until_ready(pe_gate_forward(x2, gate, sigmoid=True))
    assert jnp.allclose(out2, jax.nn.sigmoid(x2 * gate), atol=1e-5, rtol=1e-5)

    # bfloat16 input (f32 math inside the kernel, cast on store; 16-row sublane tile)
    xb = jax.random.normal(jax.random.PRNGKey(2), (2, 4, 16, 16), dtype=jnp.bfloat16)
    outb = jax.block_until_ready(pe_gate_forward(xb, gate, sigmoid=True))
    refb = jax.nn.sigmoid(xb.astype(jnp.float32) * gate).astype(jnp.bfloat16)
    assert outb.dtype == jnp.bfloat16
    assert jnp.allclose(outb.astype(jnp.float32), refb.astype(jnp.float32),
                        atol=1e-2, rtol=1e-2)

    print("KERNEL_OK")
</pallas_src>

<mosaic_0001>
module attributes {stable_mosaic.version = 11 : i64} {
  func.func @_pe_gate_kernel_sigmoid(%arg0: i32, %arg1: memref<1xf32, #tpu.memory_space<smem>>, %arg2: memref<8x128xf32, #tpu.memory_space<vmem>>, %arg3: memref<8x128xf32, #tpu.memory_space<vmem>>) attributes {dimension_semantics = [#tpu.dimension_semantics<parallel>], iteration_bounds = array<i64: 2>, scalar_prefetch = 0 : i64, scratch_operands = 0 : i64, tpu.core_type = #tpu.core_type<tc>, window_params = [{transform_indices = @transform_0, window_bounds = array<i64: 1>}, {transform_indices = @transform_1, window_bounds = array<i64: 8, 128>}, {transform_indices = @transform_2, window_bounds = array<i64: 8, 128>}]} {
    %c0 = arith.constant 0 : index
    %0 = memref.load %arg1[%c0] : memref<1xf32, #tpu.memory_space<smem>>
    %c0_0 = arith.constant 0 : index
    %c0_1 = arith.constant 0 : index
    %1 = vector.load %arg2[%c0_0, %c0_1] : memref<8x128xf32, #tpu.memory_space<vmem>>, vector<8x128xf32>
    %2 = vector.broadcast %0 : f32 to vector<8x128xf32>
    %3 = arith.mulf %1, %2 : vector<8x128xf32>
    %cst = arith.constant 0.000000e+00 : f32
    %4 = vector.broadcast %cst : f32 to vector<8x128xf32>
    %5 = arith.subf %4, %3 : vector<8x128xf32>
    %6 = math.exp %5 : vector<8x128xf32>
    %cst_2 = arith.constant 1.000000e+00 : f32
    %7 = vector.broadcast %cst_2 : f32 to vector<8x128xf32>
    %8 = arith.addf %7, %6 : vector<8x128xf32>
    %9 = tpu.reciprocal %8 : vector<8x128xf32> -> vector<8x128xf32>
    %c0_3 = arith.constant 0 : index
    %c0_4 = arith.constant 0 : index
    %10 = vector.load %arg3[%c0_3, %c0_4] : memref<8x128xf32, #tpu.memory_space<vmem>>, vector<8x128xf32>
    tpu.vector_store %arg3[%c0_3, %c0_4], %9 {strides = array<i32>} : memref<8x128xf32, #tpu.memory_space<vmem>>, vector<8x128xf32>,
    return
  }
  func.func @transform_0(%arg0: i32) -> i32 {
    %c0_i32 = arith.constant 0 : i32
    %c0_i32_0 = arith.constant 0 : i32
    return %c0_i32 : i32
  }
  func.func @transform_1(%arg0: i32) -> (i32, i32) {
    %c0_i32 = arith.constant 0 : i32
    %c0_i32_0 = arith.constant 0 : i32
    return %arg0, %c0_i32 : i32, i32
  }
  func.func @transform_2(%arg0: i32) -> (i32, i32) {
    %c0_i32 = arith.constant 0 : i32
    %c0_i32_0 = arith.constant 0 : i32
    return %arg0, %c0_i32 : i32, i32
  }
}

</mosaic_0001>

<llo_original>
// kernel: pe_gate_forward.1
$region0: #{pe_gate_forward.1}
  #allocation0 [shape = 'u32[]', space=smem, size = 0x4, offset = 0x4, fixed_abs, tag = 'smem constant byte address 0x4 - core index']
  #allocation1 [shape = 'u32[144,128]{1,0:T(1,128)}', space=vmem, size = 0x12000, scoped, tag = 'internal scratch']
  #allocation2 [shape = 'f32[1]{0:T(128)S(6)}', space=smem, size = 0x200, scoped, tag = 'scoped memory for pe_gate_forward.1']
  %s0 = inlined_call_operand.<no memory space> [shape: f32[1], index: 0, kind: input, shape index: {}]
  %s1 = inlined_call_operand.vmem [shape: f32[16,128], index: 1, kind: input, shape index: {}]
  %s2 = inlined_call_operand.vmem [shape: f32[16,128], index: 2, kind: output, shape index: {}]
  %s3 = sld [smem:[#allocation0]]
  $region41: #{pe_gate_forward.1} parent=0
    _
  %s5 = ssub.s32 1, %s3
  %s6 = scalar_select 0, %s5, %s3
  %7 = sst [smem:[#allocation2]] %s0
  loop: start=0, step=1, limit=4
  $region2: #{pe_gate_forward.1} parent=0 // loop_pre_header
    _
  $region3: #{pe_gate_forward.1} parent=0 // loop_header
    %s9 = sphi 0, %s13
    %p10 = scmp.ge.s32.totalorder %s9, 4
    %s17 = sphi 0, %s17
    %s19 = sphi 0, %s17
    %s20 = sphi 0, %s19
    %s34 = sphi 0, %s20
    %s40 = sphi 0, %s42
    %s43 = sphi 0, %s40
    %s44 = sphi 0, %s43
    %s60 = sphi 0, %s44
    %s66 = sphi 0, %s68
    %s69 = sphi 0, %s66
    %s70 = sphi 0, %s69
    %s86 = sphi 0, %s70
  $region4: #{pe_gate_forward.1} parent=0 // loop_header_branch
    %12 = sbr.rel (%p10) target = $region8
  $region5: #{pe_gate_forward.1} parent=0 // loop_body
    %s14 = ssub.s32 %s9, 1
    %s15 = ssub.s32 %s9, 2
    %s16 = sadd.s32 %s9, 1
    %s18 = sadd.s32 %s17, 1
    %p21 = scmp.eq.s32.totalorder %s9, 1
    %p22 = scmp.ne.s32.totalorder %s17, %s19
    %p23 = scmp.eq.s32.totalorder %s9, 0
    %p24 = por %p22, %p23
    %p25 = scmp.ne.s32.totalorder %s17, %s19
    %p26 = scmp.eq.s32.totalorder %s14, 1
    %p27 = por %p25, %p26
    %p28 = scmp.ne.s32.totalorder %s19, %s20
    %p29 = scmp.eq.s32.totalorder %s14, 0
    %p30 = por %p28, %p29
    %p31 = scmp.ne.s32.totalorder %s19, %s20
    %p32 = scmp.eq.s32.totalorder %s15, 1
    %p33 = por %p31, %p32
    %p35 = scmp.ne.s32.totalorder %s20, %s34
    %p36 = scmp.eq.s32.totalorder %s15, 0
    %p37 = por %p35, %p36
    %s38 = ssub.s32 %s9, %s16
    %p39 = scmp.eq.s32.totalorder %s38, 0
    %s41 = sadd.s32 %s40, 1
    %s42 = scalar_select %p39, %s40, %s41
    %p45 = pneg %p39
    %p46 = scmp.eq.s32.totalorder %s9, 1
    %p47 = por %p45, %p46
    %p48 = scmp.ne.s32.totalorder %s40, %s43
    %p49 = scmp.eq.s32.totalorder %s9, 0
    %p50 = por %p48, %p49
    %p51 = scmp.ne.s32.totalorder %s40, %s43
    %p52 = scmp.eq.s32.totalorder %s14, 1
    %p53 = por %p51, %p52
    %p54 = scmp.ne.s32.totalorder %s43, %s44
    %p55 = scmp.eq.s32.totalorder %s14, 0
    %p56 = por %p54, %p55
    %p57 = scmp.ne.s32.totalorder %s43, %s44
    %p58 = scmp.eq.s32.totalorder %s15, 1
    %p59 = por %p57, %p58
    %p61 = scmp.ne.s32.totalorder %s44, %s60
    %p62 = scmp.eq.s32.totalorder %s15, 0
    %p63 = por %p61, %p62
    %s64 = ssub.s32 %s9, %s16
    %p65 = scmp.eq.s32.totalorder %s64, 0
    %s67 = sadd.s32 %s66, 1
    %s68 = scalar_select %p65, %s66, %s67
    %p71 = pneg %p65
    %p72 = scmp.eq.s32.totalorder %s9, 1
    %p73 = por %p71, %p72
    %p74 = scmp.ne.s32.totalorder %s66, %s69
    %p75 = scmp.eq.s32.totalorder %s9, 0
    %p76 = por %p74, %p75
    %p77 = scmp.ne.s32.totalorder %s66, %s69
    %p78 = scmp.eq.s32.totalorder %s14, 1
    %p79 = por %p77, %p78
    %p80 = scmp.ne.s32.totalorder %s69, %s70
    %p81 = scmp.eq.s32.totalorder %s14, 0
    %p82 = por %p80, %p81
    %p83 = scmp.ne.s32.totalorder %s69, %s70
    %p84 = scmp.eq.s32.totalorder %s15, 1
    %p85 = por %p83, %p84
    %p87 = scmp.ne.s32.totalorder %s70, %s86
    %p88 = scmp.eq.s32.totalorder %s15, 0
    %p89 = por %p87, %p88
    %p90 = scmp.le.s32.totalorder 1, %s9
    %p91 = scmp.lt.s32.totalorder %s9, 3
    %p92 = pnand %p90, %p91
    %p93 = pneg %p92
    // Predicated region
    $region9: #{pe_gate_forward.1} parent=5 // pred_check
      _
    $region10: #{pe_gate_forward.1} parent=5 // pred_check_branch
      %95 = sbr.rel (%p92) target = $region12
    $region11: #{pe_gate_forward.1} parent=5 // pred_region
      %s96 = ssub.s32 %s9, 1
      // Predicated region
      $region13: #{pe_gate_forward.1} parent=11 // pred_check
        %p97 = pneg %p30
      $region14: #{pe_gate_forward.1} parent=11 // pred_check_branch
        %99 = sbr.rel (%p97) target = $region16
      $region15: #{pe_gate_forward.1} parent=11 // pred_region
        _
      $region16: #{pe_gate_forward.1} parent=11 // pred_fallthru
        _
    $region12: #{pe_gate_forward.1} parent=5 // pred_fallthru
      _
    %p100 = scmp.lt.s32.totalorder %s9, 2
    // Predicated region
    $region17: #{pe_gate_forward.1} parent=5 // pred_check
      %p101 = pneg %p100
    $region18: #{pe_gate_forward.1} parent=5 // pred_check_branch
      %103 = sbr.rel (%p101) target = $region20
    $region19: #{pe_gate_forward.1} parent=5 // pred_region
      // Predicated region
      $region21: #{pe_gate_forward.1} parent=19 // pred_check
        %p104 = pneg %p50
      $region22: #{pe_gate_forward.1} parent=19 // pred_check_branch
        %106 = sbr.rel (%p104) target = $region24
      $region23: #{pe_gate_forward.1} parent=19 // pred_region
        %p107 = scmp.lt.s32.totalorder %s9, 1
        %s108 = scalar_select %p107, %s9, 1
        %s109 = smul.addr %s108, 8
        %s110 = scalar_lea.vmem %s1, %s109
      $region24: #{pe_gate_forward.1} parent=19 // pred_fallthru
        _
    $region20: #{pe_gate_forward.1} parent=5 // pred_fallthru
      _
    %p111 = scmp.le.s32.totalorder 1, %s9
    %p112 = scmp.lt.s32.totalorder %s9, 3
    %p113 = pnand %p111, %p112
    %p114 = pneg %p113
    // Predicated region
    $region25: #{pe_gate_forward.1} parent=5 // pred_check
      _
    $region26: #{pe_gate_forward.1} parent=5 // pred_check_branch
      %116 = sbr.rel (%p113) target = $region28
    $region27: #{pe_gate_forward.1} parent=5 // pred_region
      %s117 = ssub.s32 %s9, 1
      %p118 = pneg %p30
      %p119 = pneg %p27
      %p120 = scmp.lt.s32.totalorder %s14, 1
      %s121 = scalar_select %p120, %s14, 1
      %s122 = smul.addr %s121, 8
      %s123 = scalar_lea.vmem %s1, %s122
      %p124 = pneg %p56
      %p125 = pneg %p53
      %p126 = pneg %p82
      %p127 = pneg %p79
      %p128 = scmp.lt.s32.totalorder %s14, 1
      %s129 = scalar_select %p128, %s14, 1
      %s130 = smul.addr %s129, 8
      %s131 = scalar_lea.vmem %s2, %s130
      %p132 = scmp.lt.s32.totalorder %s14, 1
      %s133 = scalar_select %p132, %s14, 1
      %s134 = smul.addr %s133, 8
      %s135 = scalar_lea.vmem %s1, %s134
      %p136 = scmp.lt.s32.totalorder %s14, 1
      %s137 = scalar_select %p136, %s14, 1
      %s138 = smul.addr %s137, 8
      %s139 = scalar_lea.vmem %s2, %s138
      %s140 = sld [smem:[#allocation2]]
      %v141 = vld [vmem:[%s135] sm:$0xff]
      %v142 = vstv %s140
      %v143 = vmul.f32 %v141, %v142
      %v144 = vsub.f32 0.0, %v143
      %v145 = vmul.f32 %v144, 1.442695
      %v146 = vpow.pop %v145
      %v147 = vadd.f32 %v146, 1.0
      %v148 = vrcp.pop %v147
      %149 = vst [vmem:[%s139] sm:$0xff] %v148
      %p150 = scmp.lt.s32.totalorder %s14, 1
      %s151 = scalar_select %p150, %s14, 1
      %s152 = smul.addr %s151, 8
      %s153 = scalar_lea.vmem %s2, %s152
      // Predicated region
      $region29: #{pe_gate_forward.1} parent=27 // pred_check
        %p154 = pneg %p79
      $region30: #{pe_gate_forward.1} parent=27 // pred_check_branch
        %156 = sbr.rel (%p154) target = $region32
      $region31: #{pe_gate_forward.1} parent=27 // pred_region
        _
      $region32: #{pe_gate_forward.1} parent=27 // pred_fallthru
        _
    $region28: #{pe_gate_forward.1} parent=5 // pred_fallthru
      _
    %p157 = scmp.le.s32.totalorder 2, %s9
    // Predicated region
    $region33: #{pe_gate_forward.1} parent=5 // pred_check
      %p158 = pneg %p157
    $region34: #{pe_gate_forward.1} parent=5 // pred_check_branch
      %160 = sbr.rel (%p158) target = $region36
    $region35: #{pe_gate_forward.1} parent=5 // pred_region
      %s161 = ssub.s32 %s9, 2
      // Predicated region
      $region37: #{pe_gate_forward.1} parent=35 // pred_check
        %p162 = pneg %p85
      $region38: #{pe_gate_forward.1} parent=35 // pred_check_branch
        %164 = sbr.rel (%p162) target = $region40
      $region39: #{pe_gate_forward.1} parent=35 // pred_region
        %p165 = scmp.lt.s32.totalorder %s15, 1
        %s166 = scalar_select %p165, %s15, 1
        %s167 = smul.addr %s166, 8
        %s168 = scalar_lea.vmem %s2, %s167
      $region40: #{pe_gate_forward.1} parent=35 // pred_fallthru
        _
    $region36: #{pe_gate_forward.1} parent=5 // pred_fallthru
      _
  $region6: #{pe_gate_forward.1} parent=0 // loop_footer
    %s13 = sadd.s32 1, %s9
  $region7: #{pe_gate_forward.1} parent=0 // loop_footer_branch
    %8 = sbr.rel target = $region3
  $region8: #{pe_gate_forward.1} parent=0 // loop_exit
    _

</llo_original>
